<compile_context>
chip_gen: v5e
topology: v5e:2x2
jax: 0.10.0
libtpu: 0.0.40
codegen_flags: <defaults>
</compile_context>

<pallas_src>
import jax
import jax.numpy as jnp
from jax.experimental import pallas as pl
from jax.experimental.pallas import tpu as pltpu


_LANES = 128                  # lane width; aligned path requires total % 128 == 0
_SINGLE_BLOCK_MAX_ROWS = 512  # <= 64K elements (256 KiB f32): one block, grid=(1,)
_MID_SPLIT_BLOCKS = 4         # mid-size arrays get ~4 pipeline steps


def _round_up(n, m):
    return ((n + m - 1) // m) * m


def _chip_kind():
    try:
        return jax.devices()[0].device_kind.lower()
    except Exception:  # pragma: no cover - defensive; fall back to safe tiling
        return ""


def _make_trapezoid_kernel(a, d, inv_ba, inv_dc, compute_dtype):
    """Kernel with the scalar parameters baked in as closure constants."""
    a = float(a)
    d = float(d)
    inv_ba = float(inv_ba)
    inv_dc = float(inv_dc)

    def kernel(x_ref, o_ref):
        # For f32 (and native-bf16 on v6e/v7x) this cast is a no-op; otherwise
        # it is a cheap per-tile VMEM-local upcast.
        x = x_ref[...].astype(compute_dtype)
        left = (x - a) * inv_ba           # (x - a) / (b - a)
        right = (d - x) * inv_dc          # (d - x) / (d - c)
        mf = jnp.minimum(jnp.minimum(left, 1.0), right)
        o_ref[...] = jnp.maximum(mf, 0.0).astype(o_ref.dtype)

    return kernel


def trapezoidal_membership(x, a, b, c, d):
    """Elementwise trapezoidal membership function via Pallas.

    Matches torch: max(min(min((x-a)/(b-a), 1), (d-x)/(d-c)), 0).
    Works for arbitrary input shapes; a, b, c, d are Python floats.
    """
    orig_shape = x.shape
    orig_dtype = x.dtype
    total = int(x.size)

    # Hoist the two divides out of the kernel (two VPU multiplies per element
    # in the body).  NOTE: degenerate b == a or d == c divides by zero here
    # (inf baked into the reciprocal); boundary points then give NaN rather
    # than torch's exact inf/NaN propagation.  The PyTorch reference divides
    # by zero in that case too, so this is a documented edge, not a guard.
    inv_ba = 1.0 / (float(b) - float(a))
    inv_dc = 1.0 / (float(d) - float(c))

    kind = _chip_kind()
    # ~4 MiB f32 tiles on v7x (3.2 TB/s HBM amortizes the ~0.35us per-step
    # overhead), ~2 MiB elsewhere (fits v5e's 16 MiB scoped-VMEM default when
    # double-buffered for input + output).
    target_tile_rows = 8192 if "v7" in kind else 4096

    # Compute dtype: f32 stays f32; bf16 stays bf16 on v6e/v7x (native bf16
    # VPU); bf16-on-v5e and every other dtype upcast to f32 per tile.
    if orig_dtype == jnp.float32:
        compute_dtype = jnp.float32
    elif orig_dtype == jnp.bfloat16 and "v5" not in kind:
        compute_dtype = jnp.bfloat16
    else:
        compute_dtype = jnp.float32

    kernel = _make_trapezoid_kernel(a, d, inv_ba, inv_dc, compute_dtype)

    flat = x.reshape(-1)
    padded_total = _round_up(total, _LANES)
    if padded_total != total:
        # Rare misaligned case: pad by at most 127 elements so the flat array
        # reshapes to a lane-dense slab.  The aligned common case is a pure
        # (free) reshape with zero extra HBM traffic.
        # TODO(synk): replace this pad + output slice with a masked last-row
        # store driven by a scalar-prefetched `total` to make the misaligned
        # path zero-copy as well.
        flat = jnp.pad(flat, (0, padded_total - total))

    rows = padded_total // _LANES
    x2d = flat.reshape(rows, _LANES)

    if rows <= _SINGLE_BLOCK_MAX_ROWS:
        # Tiny input: one block, grid=(1,); pipeline overhead would dominate.
        tile_rows = rows
    else:
        # At least ~_MID_SPLIT_BLOCKS pipeline steps (DMA/compute overlap and
        # 2-TC sharding on v7x), capped at the per-chip tile-size target for
        # large inputs.  Tile rows are a multiple of 8, so the partial last
        # block produced by the cdiv grid is legal and masked by Pallas.
        tile_rows = min(target_tile_rows,
                        _round_up(pl.cdiv(rows, _MID_SPLIT_BLOCKS), 8))

    grid_steps = pl.cdiv(rows, tile_rows)

    out2d = pl.pallas_call(
        kernel,
        out_shape=jax.ShapeDtypeStruct((rows, _LANES), orig_dtype),
        grid=(grid_steps,),
        in_specs=[pl.BlockSpec((tile_rows, _LANES), lambda i: (i, 0))],
        out_specs=pl.BlockSpec((tile_rows, _LANES), lambda i: (i, 0)),
        compiler_params=pltpu.CompilerParams(
            dimension_semantics=("parallel",),  # v7x: shard row-blocks over 2 TCs
        ),
    )(x2d)

    out_flat = out2d.reshape(-1)
    if padded_total != total:
        out_flat = out_flat[:total]
    return out_flat.reshape(orig_shape)


def trapezoidal_membership_ref(x, a, b, c, d):
    xf = x.astype(jnp.float32)
    return jnp.maximum(
        jnp.minimum(
            jnp.minimum((xf - a) / (b - a), jnp.ones_like(xf)),
            (d - xf) / (d - c),
        ),
        jnp.zeros_like(xf),
    ).astype(x.dtype)


if __name__ == "__main__":
    key = jax.random.PRNGKey(0)

    # Case 1: the "middle" membership function from get_range_functions():
    # a=-1, b=-0.5, c=0.5, d=1; NCHW input (2, 4, 16, 16).  Aligned zero-copy
    # path, single block.
    a, b, c, d = -1.0, -0.5, 0.5, 1.0
    x = jax.random.uniform(
        key, (2, 4, 16, 16), dtype=jnp.float32, minval=-1.5, maxval=1.5
    )
    out = jax.block_until_ready(trapezoidal_membership(x, a, b, c, d))
    ref = trapezoidal_membership_ref(x, a, b, c, d)
    assert out.shape == x.shape and out.dtype == x.dtype
    assert jnp.allclose(out, ref, atol=1e-5, rtol=1e-5)

    # Case 2: odd-sized input (exercises the <=127-element pad path) with the
    # "right-open" parameters a=0, b=0.5, c=1e10, d=1e10+1.
    a2, b2, c2, d2 = 0.0, 0.5, 1.0e10, 1.0e10 + 1.0
    x2 = jax.random.uniform(
        jax.random.PRNGKey(1), (3, 5, 7), dtype=jnp.float32, minval=-1.0, maxval=1.0
    )
    out2 = jax.block_until_ready(trapezoidal_membership(x2, a2, b2, c2, d2))
    ref2 = trapezoidal_membership_ref(x2, a2, b2, c2, d2)
    assert out2.shape == x2.shape and out2.dtype == x2.dtype
    assert jnp.allclose(out2, ref2, atol=1e-5, rtol=1e-5)

    # Case 3: mid-size aligned input exercising the multi-step pipelined path
    # (4 grid steps, partial-block-capable cdiv grid).
    x3 = jax.random.uniform(
        jax.random.PRNGKey(2), (8, 4, 96, 128), dtype=jnp.float32,
        minval=-1.5, maxval=1.5
    )
    out3 = jax.block_until_ready(trapezoidal_membership(x3, a, b, c, d))
    ref3 = trapezoidal_membership_ref(x3, a, b, c, d)
    assert out3.shape == x3.shape and out3.dtype == x3.dtype
    assert jnp.allclose(out3, ref3, atol=1e-5, rtol=1e-5)

    print("KERNEL_OK")
</pallas_src>

<mosaic_0001>
module attributes {stable_mosaic.version = 11 : i64} {
  func.func @kernel(%arg0: i32, %arg1: memref<16x128xf32, #tpu.memory_space<vmem>>, %arg2: memref<16x128xf32, #tpu.memory_space<vmem>>) attributes {dimension_semantics = [#tpu.dimension_semantics<parallel>], iteration_bounds = array<i64: 1>, scalar_prefetch = 0 : i64, scratch_operands = 0 : i64, tpu.core_type = #tpu.core_type<tc>, window_params = [{transform_indices = @transform_0, window_bounds = array<i64: 16, 128>}, {transform_indices = @transform_1, window_bounds = array<i64: 16, 128>}]} {
    %c0 = arith.constant 0 : index
    %c0_0 = arith.constant 0 : index
    %0 = vector.load %arg1[%c0, %c0_0] : memref<16x128xf32, #tpu.memory_space<vmem>>, vector<16x128xf32>
    %cst = arith.constant -1.000000e+00 : f32
    %1 = vector.broadcast %cst : f32 to vector<16x128xf32>
    %2 = arith.subf %0, %1 : vector<16x128xf32>
    %cst_1 = arith.constant 2.000000e+00 : f32
    %3 = vector.broadcast %cst_1 : f32 to vector<16x128xf32>
    %4 = arith.mulf %2, %3 : vector<16x128xf32>
    %cst_2 = arith.constant 1.000000e+00 : f32
    %5 = vector.broadcast %cst_2 : f32 to vector<16x128xf32>
    %6 = arith.subf %5, %0 : vector<16x128xf32>
    %cst_3 = arith.constant 2.000000e+00 : f32
    %7 = vector.broadcast %cst_3 : f32 to vector<16x128xf32>
    %8 = arith.mulf %6, %7 : vector<16x128xf32>
    %cst_4 = arith.constant 1.000000e+00 : f32
    %9 = vector.broadcast %cst_4 : f32 to vector<16x128xf32>
    %10 = arith.minimumf %4, %9 : vector<16x128xf32>
    %11 = arith.minimumf %10, %8 : vector<16x128xf32>
    %cst_5 = arith.constant 0.000000e+00 : f32
    %12 = vector.broadcast %cst_5 : f32 to vector<16x128xf32>
    %13 = arith.maximumf %11, %12 : vector<16x128xf32>
    %c0_6 = arith.constant 0 : index
    %c0_7 = arith.constant 0 : index
    %14 = vector.load %arg2[%c0_6, %c0_7] : memref<16x128xf32, #tpu.memory_space<vmem>>, vector<16x128xf32>
    tpu.vector_store %arg2[%c0_6, %c0_7], %13 {strides = array<i32>} : memref<16x128xf32, #tpu.memory_space<vmem>>, vector<16x128xf32>,
    return
  }
  func.func @transform_0(%arg0: i32) -> (i32, i32) {
    %c0_i32 = arith.constant 0 : i32
    %c0_i32_0 = arith.constant 0 : i32
    return %arg0, %c0_i32 : i32, i32
  }
  func.func @transform_1(%arg0: i32) -> (i32, i32) {
    %c0_i32 = arith.constant 0 : i32
    %c0_i32_0 = arith.constant 0 : i32
    return %arg0, %c0_i32 : i32, i32
  }
}

</mosaic_0001>

<llo_original>
// kernel: tpu_custom_call.1
$region0: #{tpu_custom_call.1}
  #allocation0 [shape = 'u32[]', space=smem, size = 0x4, offset = 0x4, fixed_abs, tag = 'smem constant byte address 0x4 - core index']
  #allocation1 [shape = 'u32[72,128]{1,0:T(1,128)}', space=vmem, size = 0x9000, scoped, tag = 'internal scratch']
  %s0 = inlined_call_operand.hbm [shape: f32[16,128], index: 0, kind: input, shape index: {}]
  %s1 = inlined_call_operand.hbm [shape: f32[16,128], index: 1, kind: output, shape index: {}]
  %s2 = sld [smem:[#allocation0]]
  $region18: #{tpu_custom_call.1} parent=0
    _
  %s4 = ssub.s32 1, %s2
  %s5 = scalar_select 0, %s4, %s2
  $region1: #{tpu_custom_call.1} parent=0
    #allocation2 [shape = 'u8[8192]{0}', space=vmem, size = 0x2000, scoped, tag = 'input window, operand 0, single buffered']
    #allocation3 [shape = 's32[1]{0}', space=sflag, size = 0x4, scoped, tag = 'scoped memory for tpu_custom_call.1']
    #allocation4 [shape = 's32[1]{0}', space=sflag, size = 0x4, scoped, tag = 'scoped memory for tpu_custom_call.1']
    #allocation5 [shape = 'u8[8192]{0}', space=vmem, size = 0x2000, scoped, tag = 'output window, operand 0, single buffered']
    %6 = vsyncpa [#allocation3], 0
    %7 = vsyncpa [#allocation4], 0
    // Predicated region
    $region2: #{tpu_custom_call.1} parent=1 // pred_check
      _
    $region3: #{tpu_custom_call.1} parent=1 // pred_check_branch
      %9 = sbr.rel (0) target = $region5
    $region4: #{tpu_custom_call.1} parent=1 // pred_region
      %11 = vsyncadd [#allocation3], 0
      %s12 = sshll.u32 %s0, 4
      %s13 = int_to_ptr.hbm [resolvable:$true] %s12
      %s14 = sshll.u32 [#allocation2], 4
      %s15 = int_to_ptr.vmem [resolvable:$true] %s14
      %20 = dma.hbm_to_vmem [thread:$0]  %s13, 256, %s15, [#allocation3], 128, 128, 8
    $region5: #{tpu_custom_call.1} parent=1 // pred_fallthru
      _
    // Predicated region
    $region6: #{tpu_custom_call.1} parent=1 // pred_check
      _
    $region7: #{tpu_custom_call.1} parent=1 // pred_check_branch
      %22 = sbr.rel (0) target = $region9
    $region8: #{tpu_custom_call.1} parent=1 // pred_region
      %24 = dma.done [#allocation3], 256
    $region9: #{tpu_custom_call.1} parent=1 // pred_fallthru
      _
    %v25 = vld [vmem:[#allocation2] sm:$0xff]
    %v26 = vld [vmem:[#allocation2 + $0x8] sm:$0xff]
    %v27 = vsub.f32 %v25, -1.0
    %v28 = vsub.f32 %v26, -1.0
    %v29 = vmul.f32 %v27, 2.0
    %v30 = vmul.f32 %v28, 2.0
    %v31 = vsub.f32 1.0, %v25
    %v32 = vsub.f32 1.0, %v26
    %v33 = vmul.f32 %v31, 2.0
    %v34 = vmul.f32 %v32, 2.0
    %v35 = vmin.f32 %v29, 1.0
    %v36 = vmin.f32 %v30, 1.0
    %v37 = vmin.f32 %v35, %v33
    %v38 = vmin.f32 %v36, %v34
    %v39 = vmax.f32 %v37, 0.0
    %v40 = vmax.f32 %v38, 0.0
    %41 = vst [vmem:[#allocation5] sm:$0xff] %v39
    %42 = vst [vmem:[#allocation5 + $0x8] sm:$0xff] %v40
    // Predicated region
    $region10: #{tpu_custom_call.1} parent=1 // pred_check
      _
    $region11: #{tpu_custom_call.1} parent=1 // pred_check_branch
      %44 = sbr.rel (0) target = $region13
    $region12: #{tpu_custom_call.1} parent=1 // pred_region
      %46 = vsyncadd [#allocation4], 0
      %s47 = sshll.u32 [#allocation5], 4
      %s48 = int_to_ptr.vmem [resolvable:$true] %s47
      %s49 = sshll.u32 %s1, 4
      %s50 = int_to_ptr.hbm [resolvable:$true] %s49
      %55 = dma.vmem_to_hbm [thread:$0]  %s48, 256, %s50, [#allocation4], 128, 128, 8
    $region13: #{tpu_custom_call.1} parent=1 // pred_fallthru
      _
    // Predicated region
    $region14: #{tpu_custom_call.1} parent=1 // pred_check
      _
    $region15: #{tpu_custom_call.1} parent=1 // pred_check_branch
      %57 = sbr.rel (0) target = $region17
    $region16: #{tpu_custom_call.1} parent=1 // pred_region
      %59 = dma.done [#allocation4], 256
    $region17: #{tpu_custom_call.1} parent=1 // pred_fallthru
      _
    %60 = vsyncpa [#allocation3], 1
    %61 = vsyncpa [#allocation4], 1

</llo_original>
